<compile_context>
chip_gen: v5e
topology: v5e:2x2
jax: 0.10.0
libtpu: 0.0.40
codegen_flags: <defaults>
</compile_context>

<pallas_src>
import jax
import jax.numpy as jnp
from jax.experimental import pallas as pl
from jax.experimental.pallas import tpu as pltpu


def _round_up(x, m):
    return ((x + m - 1) // m) * m


def _protofeat_kernel(feat_ref, sc_ref, out_ref):
    """Accumulate (attsize, dim_f) partial prototype features for one partition."""

    @pl.when(pl.program_id(1) == 0)
    def _():
        out_ref[...] = jnp.zeros_like(out_ref)

    feat = feat_ref[...]                                   # (chunk, dim_f) f32
    # F.normalize(feature, dim=dim_f): per-column L2 norm.  Clamp the sum of
    # squares (eps^2) so all-zero (padded) rows normalize to 0, matching
    # F.normalize semantics; rsqrt runs on the otherwise-idle EUP slot.
    sumsq = jnp.sum(feat * feat, axis=1, keepdims=True)    # (chunk, 1)
    inv = jax.lax.rsqrt(jnp.maximum(sumsq, 1e-24))
    feat_n = (feat * inv).astype(jnp.bfloat16)

    sc = sc_ref[...]                                       # (attsize, chunk) bf16

    out_ref[...] += jnp.dot(sc, feat_n, preferred_element_type=jnp.float32)


def _finalize_kernel(pf_ref, attsum_ref, att_ref, proto_ref, w_ref, lamda_ref,
                     loss_ref):
    """Combine partition partials, blend with prototype, classifier + CE loss."""
    pf = jnp.sum(pf_ref[...], axis=0)                      # (attsize, dim_f)
    protofeat = pf / (attsum_ref[...] + 1e-9)              # broadcast (attsize,1)

    lam = lamda_ref[0]                                     # scalar from SMEM
    proto = proto_ref[...] * lam + protofeat * (1.0 - lam)

    # Re-associated classifier: pw = proto @ W (attsize, C), prob = att @ pw.
    # Avoids the (num_classes, dim_f) intermediate of the naive association.
    pw = jnp.dot(proto, w_ref[...], preferred_element_type=jnp.float32)
    prob = jnp.dot(att_ref[...], pw, preferred_element_type=jnp.float32)

    # log_softmax along dim 1
    m = jnp.max(prob, axis=1, keepdims=True)
    z = prob - m
    lse = jnp.log(jnp.sum(jnp.exp(z), axis=1, keepdims=True))
    logp = z - lse

    # loss = mean(-diag(logp))   (weight_ce = identity)
    n = prob.shape[0]
    row = jax.lax.broadcasted_iota(jnp.int32, (n, n), 0)
    col = jax.lax.broadcasted_iota(jnp.int32, (n, n), 1)
    diag_mask = (row == col).astype(jnp.float32)
    loss_ref[...] = -jnp.sum(logp * diag_mask, keepdims=True) / n


def compute_proto_loss(feature, score, label, att, prototype, W, lamda,
                       *, chunk=512, partitions=2):
    """feature: (B, dim_f, H, W); score: (B, attsize, region); label: (B,) int."""
    B, dim_f, H, Wd = feature.shape
    region = H * Wd
    attsize = score.shape[1]

    N = B * region
    # Chunk of the flattened batch*region contraction axis.  It is the lane dim
    # of the score block, so keep it a multiple of 128 (MXU-depth friendly on
    # v5e as well); pad with zero columns (they contribute nothing).
    chunk = min(chunk, _round_up(-(-N // partitions), 128))
    chunk = _round_up(chunk, 128)
    n_chunks = -(-N // (partitions * chunk))
    n_pad = partitions * n_chunks * chunk

    # attscore = att[label] (detached gather) and its batch-sum: tiny JAX glue.
    attscore = att[label].astype(jnp.float32)              # (B, attsize)
    attsum = jnp.sum(attscore, axis=0)[:, None]            # (attsize, 1)

    # Feature laid out (N, dim_f): dim_f lane-dense so the contraction is a
    # plain (attsize, K) @ (K, dim_f) matmul.  One-time HBM transpose.
    feat = feature.reshape(B, dim_f, region).astype(jnp.float32)
    feat = jnp.transpose(feat, (0, 2, 1)).reshape(N, dim_f)
    feat = jnp.pad(feat, ((0, n_pad - N), (0, 0)))

    # Fold the (detached) attribute score into the score operand; cast the
    # folded operand to bf16 in the wrapper to halve its DMA bytes.
    sc = score.reshape(B, attsize, region).astype(jnp.float32)
    sc = sc * attscore[:, :, None]
    sc = jnp.transpose(sc, (1, 0, 2)).reshape(attsize, N)
    sc = jnp.pad(sc, ((0, 0), (0, n_pad - N))).astype(jnp.bfloat16)

    pf_partials = pl.pallas_call(
        _protofeat_kernel,
        out_shape=jax.ShapeDtypeStruct((partitions, attsize, dim_f), jnp.float32),
        grid_spec=pltpu.PrefetchScalarGridSpec(
            num_scalar_prefetch=0,
            grid=(partitions, n_chunks),
            in_specs=[
                pl.BlockSpec((chunk, dim_f), lambda p, c: (p * n_chunks + c, 0)),
                pl.BlockSpec((attsize, chunk), lambda p, c: (0, p * n_chunks + c)),
            ],
            out_specs=pl.BlockSpec((None, attsize, dim_f), lambda p, c: (p, 0, 0)),
        ),
        compiler_params=pltpu.CompilerParams(
            dimension_semantics=("parallel", "arbitrary"),
            vmem_limit_bytes=64 * 1024 * 1024),
    )(feat, sc)

    lamda1 = lamda.reshape(1).astype(jnp.float32)
    loss = pl.pallas_call(
        _finalize_kernel,
        out_shape=jax.ShapeDtypeStruct((1, 1), jnp.float32),
        in_specs=[
            pl.BlockSpec(memory_space=pltpu.MemorySpace.VMEM),   # pf partials
            pl.BlockSpec(memory_space=pltpu.MemorySpace.VMEM),   # attsum
            pl.BlockSpec(memory_space=pltpu.MemorySpace.VMEM),   # att
            pl.BlockSpec(memory_space=pltpu.MemorySpace.VMEM),   # prototype
            pl.BlockSpec(memory_space=pltpu.MemorySpace.VMEM),   # W
            pl.BlockSpec(memory_space=pltpu.MemorySpace.SMEM),   # lamda scalar
        ],
        out_specs=pl.BlockSpec(memory_space=pltpu.MemorySpace.VMEM),
    )(pf_partials, attsum, att.astype(jnp.float32),
      prototype.astype(jnp.float32), W.astype(jnp.float32), lamda1)

    return loss[0, 0]


def _reference_loss(feature, score, label, att, prototype, W, lamda):
    """Pure-JAX reference mirroring the PyTorch forward."""
    B, dim_f, H, Wd = feature.shape
    region = H * Wd
    feat = feature.reshape(B, dim_f, region)
    norm = jnp.sqrt(jnp.sum(feat * feat, axis=1, keepdims=True))
    feat = feat / jnp.maximum(norm, 1e-12)
    protofeat = jnp.einsum('bir,bkr->bki', feat, score)
    attscore = att[label]
    protofeat = jnp.einsum('bkr,bk->bkr', protofeat, attscore)
    protofeat = jnp.sum(protofeat, axis=0)
    attsum = jnp.sum(attscore, axis=0)[:, None]
    protofeat = protofeat / (attsum + 1e-9)
    proto = prototype * lamda[0] + protofeat * (1.0 - lamda[0])
    prob = jnp.einsum('na,af,fb->nb', att, proto, W)
    logp = jax.nn.log_softmax(prob, axis=1)
    eye = jnp.eye(prob.shape[0], dtype=jnp.float32)
    return jnp.mean(-jnp.einsum('bk,bk->b', logp, eye))


if __name__ == "__main__":
    key = jax.random.PRNGKey(0)
    k1, k2, k3, k4, k5, k6 = jax.random.split(key, 6)

    B, dim_f, H, W_sp = 2, 32, 4, 4
    region = H * W_sp
    attsize = 8
    num_classes = 6

    feature = jax.random.normal(k1, (B, dim_f, H, W_sp), dtype=jnp.float32)
    score = jax.random.uniform(k2, (B, attsize, region), dtype=jnp.float32)
    label = jax.random.randint(k3, (B,), 0, num_classes)

    # att parameter: F.normalize(att) along dim=1 (attribute annotations are
    # non-negative in the ZSL setting this module comes from).
    att_raw = jax.random.uniform(k4, (num_classes, attsize), dtype=jnp.float32)
    att = att_raw / jnp.maximum(
        jnp.sqrt(jnp.sum(att_raw * att_raw, axis=1, keepdims=True)), 1e-12)

    # TODO(synk): computeproto() builds the prototype from a dataset+model;
    # replaced here with a deterministic random init of the same shape.
    prototype = jax.random.normal(k5, (attsize, dim_f), dtype=jnp.float32)
    W = jax.random.normal(k6, (dim_f, num_classes), dtype=jnp.float32)
    lamda = jnp.array([0.5], dtype=jnp.float32)

    loss = compute_proto_loss(feature, score, label, att, prototype, W, lamda)
    loss = jax.block_until_ready(loss)

    ref = _reference_loss(feature, score, label, att, prototype, W, lamda)
    # bf16 MXU operands with f32 accumulation: ~1e-3 relative error vs the
    # pure-f32 reference, hence the looser tolerance.
    assert jnp.allclose(loss, ref, rtol=2e-2, atol=2e-2), (loss, ref)

    print("KERNEL_OK")
</pallas_src>

<mosaic_0001>
module attributes {stable_mosaic.version = 11 : i64} {
  func.func @_protofeat_kernel(%arg0: i32, %arg1: i32, %arg2: memref<128x32xf32, #tpu.memory_space<vmem>>, %arg3: memref<8x128xbf16, #tpu.memory_space<vmem>>, %arg4: memref<1x8x32xf32, #tpu.memory_space<vmem>>) attributes {dimension_semantics = [#tpu.dimension_semantics<parallel>, #tpu.dimension_semantics<arbitrary>], iteration_bounds = array<i64: 2, 1>, scalar_prefetch = 0 : i64, scratch_operands = 0 : i64, tpu.core_type = #tpu.core_type<tc>, window_params = [{transform_indices = @transform_0, window_bounds = array<i64: 128, 32>}, {transform_indices = @transform_1, window_bounds = array<i64: 8, 128>}, {transform_indices = @transform_2, window_bounds = array<i64: 1, 8, 32>}]} {
    %c0_i32 = arith.constant 0 : i32
    %0 = arith.cmpi eq, %arg1, %c0_i32 : i32
    %1 = arith.extui %0 : i1 to i32
    %c0_i32_0 = arith.constant 0 : i32
    %2 = arith.cmpi ne, %1, %c0_i32_0 : i32
    scf.if %2 {
      %cst_12 = arith.constant 0.000000e+00 : f32
      %21 = vector.broadcast %cst_12 : f32 to vector<8x32xf32>
      %c0_13 = arith.constant 0 : index
      %c0_14 = arith.constant 0 : index
      %c0_15 = arith.constant 0 : index
      %22 = vector.load %arg4[%c0_13, %c0_14, %c0_15] : memref<1x8x32xf32, #tpu.memory_space<vmem>>, vector<1x8x32xf32>
      %23 = vector.shape_cast %22 : vector<1x8x32xf32> to vector<8x32xf32>
      %24 = vector.shape_cast %21 : vector<8x32xf32> to vector<1x8x32xf32>
      tpu.vector_store %arg4[%c0_13, %c0_14, %c0_15], %24 {strides = array<i32>} : memref<1x8x32xf32, #tpu.memory_space<vmem>>, vector<1x8x32xf32>,
    } else {
    }
    %c0 = arith.constant 0 : index
    %c0_1 = arith.constant 0 : index
    %3 = vector.load %arg2[%c0, %c0_1] : memref<128x32xf32, #tpu.memory_space<vmem>>, vector<128x32xf32>
    %4 = arith.mulf %3, %3 : vector<128x32xf32>
    %cst = arith.constant dense<0.000000e+00> : vector<128xf32>
    %5 = vector.multi_reduction <add>, %4, %cst [1] : vector<128x32xf32> to vector<128xf32>
    %6 = vector.shape_cast %5 : vector<128xf32> to vector<128x1xf32>
    %cst_2 = arith.constant 1.000000e-24 : f32
    %7 = vector.broadcast %cst_2 : f32 to vector<128x1xf32>
    %8 = arith.maximumf %6, %7 : vector<128x1xf32>
    %9 = math.rsqrt %8 : vector<128x1xf32>
    %10 = vector.broadcast %9 : vector<128x1xf32> to vector<128x32xf32>
    %11 = arith.mulf %3, %10 : vector<128x32xf32>
    %12 = arith.truncf %11 : vector<128x32xf32> to vector<128x32xbf16>
    %c0_3 = arith.constant 0 : index
    %c0_4 = arith.constant 0 : index
    %13 = vector.load %arg3[%c0_3, %c0_4] : memref<8x128xbf16, #tpu.memory_space<vmem>>, vector<8x128xbf16>
    %c0_5 = arith.constant 0 : index
    %c0_6 = arith.constant 0 : index
    %c0_7 = arith.constant 0 : index
    %14 = vector.load %arg4[%c0_5, %c0_6, %c0_7] : memref<1x8x32xf32, #tpu.memory_space<vmem>>, vector<1x8x32xf32>
    %15 = vector.shape_cast %14 : vector<1x8x32xf32> to vector<8x32xf32>
    %cst_8 = arith.constant dense<0.000000e+00> : vector<8x32xf32>
    %16 = tpu.matmul %13, %12, %cst_8 {dimension_numbers = #tpu.dot_dimension_numbers<[1], [0], [0], [1], [0, 0, 1, 1], [], []>} : vector<8x128xbf16>, vector<128x32xbf16>, vector<8x32xf32> -> vector<8x32xf32>
    %17 = arith.addf %15, %16 : vector<8x32xf32>
    %c0_9 = arith.constant 0 : index
    %c0_10 = arith.constant 0 : index
    %c0_11 = arith.constant 0 : index
    %18 = vector.load %arg4[%c0_9, %c0_10, %c0_11] : memref<1x8x32xf32, #tpu.memory_space<vmem>>, vector<1x8x32xf32>
    %19 = vector.shape_cast %18 : vector<1x8x32xf32> to vector<8x32xf32>
    %20 = vector.shape_cast %17 : vector<8x32xf32> to vector<1x8x32xf32>
    tpu.vector_store %arg4[%c0_9, %c0_10, %c0_11], %20 {strides = array<i32>} : memref<1x8x32xf32, #tpu.memory_space<vmem>>, vector<1x8x32xf32>,
    return
  }
  func.func @transform_0(%arg0: i32, %arg1: i32) -> (i32, i32) {
    %c1_i32 = arith.constant 1 : i32
    %0 = arith.muli %arg0, %c1_i32 : i32
    %1 = arith.addi %0, %arg1 : i32
    %c0_i32 = arith.constant 0 : i32
    %c0_i32_0 = arith.constant 0 : i32
    return %1, %c0_i32 : i32, i32
  }
  func.func @transform_1(%arg0: i32, %arg1: i32) -> (i32, i32) {
    %c1_i32 = arith.constant 1 : i32
    %0 = arith.muli %arg0, %c1_i32 : i32
    %1 = arith.addi %0, %arg1 : i32
    %c0_i32 = arith.constant 0 : i32
    %c0_i32_0 = arith.constant 0 : i32
    return %c0_i32, %1 : i32, i32
  }
  func.func @transform_2(%arg0: i32, %arg1: i32) -> (i32, i32, i32) {
    %c0_i32 = arith.constant 0 : i32
    %c0_i32_0 = arith.constant 0 : i32
    %c0_i32_1 = arith.constant 0 : i32
    return %arg0, %c0_i32, %c0_i32_0 : i32, i32, i32
  }
}

</mosaic_0001>

<llo_original>
// kernel: tpu_custom_call.1
$region0: #{tpu_custom_call.1}
  #allocation0 [shape = 'u32[]', space=smem, size = 0x4, offset = 0x4, fixed_abs, tag = 'smem constant byte address 0x4 - core index']
  #allocation1 [shape = 'u32[72,128]{1,0:T(1,128)}', space=vmem, size = 0x9000, scoped, tag = 'internal scratch']
  %s0 = inlined_call_operand.vmem [shape: f32[256,32], index: 0, kind: input, shape index: {}]
  %s1 = inlined_call_operand.vmem [shape: bf16[8,256], index: 1, kind: input, shape index: {}]
  %s2 = inlined_call_operand.hbm [shape: f32[2,8,32], index: 2, kind: output, shape index: {}]
  %s3 = sld [smem:[#allocation0]]
  $region45: #{tpu_custom_call.1} parent=0
    _
  %s5 = ssub.s32 1, %s3
  %s6 = scalar_select 0, %s5, %s3
  $region1: #{tpu_custom_call.1} parent=0
    #allocation2 [shape = 'u8[8192]{0}', space=vmem, size = 0x2000, scoped, tag = 'output window, operand 0']
    #allocation3 [shape = 's32[2]{0}', space=sflag, size = 0x8, scoped, tag = 'scoped memory for tpu_custom_call.1']
    %7 = vsyncpa [#allocation3], 0
    %s8 = scalar_lea.sflag [#allocation3], 1
    %9 = vsyncpa %s8, 0
    loop: start=0, step=1, limit=4
    $region2: #{tpu_custom_call.1} parent=1 // loop_pre_header
      _
    $region3: #{tpu_custom_call.1} parent=1 // loop_header
      %s11 = sphi 0, %s15
      %p12 = scmp.ge.s32.totalorder %s11, 4
      %s18 = sphi 0, %s30
      %s19 = sphi 0, %s26
      %s20 = sphi 0, %s18
      %s21 = sphi 0, %s19
      %s22 = sphi 0, %s20
      %s23 = sphi 0, %s21
      %s35 = sphi 0, %s37
      %s38 = sphi 0, %s35
      %s39 = sphi 0, %s38
      %s55 = sphi 0, %s39
      %s63 = sphi 0, %s65
      %s66 = sphi 0, %s63
      %s67 = sphi 0, %s66
      %s83 = sphi 0, %s67
      %s89 = sphi 0, %s91
      %s92 = sphi 0, %s89
      %s93 = sphi 0, %s92
      %s109 = sphi 0, %s93
    $region4: #{tpu_custom_call.1} parent=1 // loop_header_branch
      %14 = sbr.rel (%p12) target = $region8
    $region5: #{tpu_custom_call.1} parent=1 // loop_body
      %s16 = ssub.s32 %s11, 1
      %s17 = ssub.s32 %s11, 2
      %s24 = sadd.s32 1, %s19
      %p25 = scmp.ge.s32.totalorder %s24, 1
      %s26 = scalar_select %p25, 0, %s24
      %s27 = sadd.s32 1, %s18
      %s28 = scalar_select %p25, %s27, %s18
      %p29 = scmp.ge.s32.totalorder %s28, 2
      %s30 = scalar_select %p29, 0, %s28
      %s31 = sadd.s32 %s18, %s19
      %s32 = sadd.s32 %s30, %s26
      %s33 = ssub.s32 %s31, %s32
      %p34 = scmp.eq.s32.totalorder %s33, 0
      %s36 = sadd.s32 %s35, 1
      %s37 = scalar_select %p34, %s35, %s36
      %p40 = pneg %p34
      %p41 = scmp.eq.s32.totalorder %s11, 1
      %p42 = por %p40, %p41
      %p43 = scmp.ne.s32.totalorder %s35, %s38
      %p44 = scmp.eq.s32.totalorder %s11, 0
      %p45 = por %p43, %p44
      %p46 = scmp.ne.s32.totalorder %s35, %s38
      %p47 = scmp.eq.s32.totalorder %s16, 1
      %p48 = por %p46, %p47
      %p49 = scmp.ne.s32.totalorder %s38, %s39
      %p50 = scmp.eq.s32.totalorder %s16, 0
      %p51 = por %p49, %p50
      %p52 = scmp.ne.s32.totalorder %s38, %s39
      %p53 = scmp.eq.s32.totalorder %s17, 1
      %p54 = por %p52, %p53
      %p56 = scmp.ne.s32.totalorder %s39, %s55
      %p57 = scmp.eq.s32.totalorder %s17, 0
      %p58 = por %p56, %p57
      %s59 = sadd.s32 %s18, %s19
      %s60 = sadd.s32 %s30, %s26
      %s61 = ssub.s32 %s59, %s60
      %p62 = scmp.eq.s32.totalorder %s61, 0
      %s64 = sadd.s32 %s63, 1
      %s65 = scalar_select %p62, %s63, %s64
      %p68 = pneg %p62
      %p69 = scmp.eq.s32.totalorder %s11, 1
      %p70 = por %p68, %p69
      %p71 = scmp.ne.s32.totalorder %s63, %s66
      %p72 = scmp.eq.s32.totalorder %s11, 0
      %p73 = por %p71, %p72
      %p74 = scmp.ne.s32.totalorder %s63, %s66
      %p75 = scmp.eq.s32.totalorder %s16, 1
      %p76 = por %p74, %p75
      %p77 = scmp.ne.s32.totalorder %s66, %s67
      %p78 = scmp.eq.s32.totalorder %s16, 0
      %p79 = por %p77, %p78
      %p80 = scmp.ne.s32.totalorder %s66, %s67
      %p81 = scmp.eq.s32.totalorder %s17, 1
      %p82 = por %p80, %p81
      %p84 = scmp.ne.s32.totalorder %s67, %s83
      %p85 = scmp.eq.s32.totalorder %s17, 0
      %p86 = por %p84, %p85
      %s87 = ssub.s32 %s18, %s30
      %p88 = scmp.eq.s32.totalorder %s87, 0
      %s90 = sadd.s32 %s89, 1
      %s91 = scalar_select %p88, %s89, %s90
      %p94 = pneg %p88
      %p95 = scmp.eq.s32.totalorder %s11, 1
      %p96 = por %p94, %p95
      %p97 = scmp.ne.s32.totalorder %s89, %s92
      %p98 = scmp.eq.s32.totalorder %s11, 0
      %p99 = por %p97, %p98
      %p100 = scmp.ne.s32.totalorder %s89, %s92
      %p101 = scmp.eq.s32.totalorder %s16, 1
      %p102 = por %p100, %p101
      %p103 = scmp.ne.s32.totalorder %s92, %s93
      %p104 = scmp.eq.s32.totalorder %s16, 0
      %p105 = por %p103, %p104
      %p106 = scmp.ne.s32.totalorder %s92, %s93
      %p107 = scmp.eq.s32.totalorder %s17, 1
      %p108 = por %p106, %p107
      %p110 = scmp.ne.s32.totalorder %s93, %s109
      %p111 = scmp.eq.s32.totalorder %s17, 0
      %p112 = por %p110, %p111
      %p113 = scmp.le.s32.totalorder 1, %s11
      %p114 = scmp.lt.s32.totalorder %s11, 3
      %p115 = pnand %p113, %p114
      %p116 = pneg %p115
      // Predicated region
      $region9: #{tpu_custom_call.1} parent=5 // pred_check
        _
      $region10: #{tpu_custom_call.1} parent=5 // pred_check_branch
        %118 = sbr.rel (%p115) target = $region12
      $region11: #{tpu_custom_call.1} parent=5 // pred_region
        %s119 = ssub.s32 %s11, 1
      $region12: #{tpu_custom_call.1} parent=5 // pred_fallthru
        _
      %p120 = scmp.lt.s32.totalorder %s11, 2
      // Predicated region
      $region13: #{tpu_custom_call.1} parent=5 // pred_check
        %p121 = pneg %p120
      $region14: #{tpu_custom_call.1} parent=5 // pred_check_branch
        %123 = sbr.rel (%p121) target = $region16
      $region15: #{tpu_custom_call.1} parent=5 // pred_region
        // Predicated region
        $region17: #{tpu_custom_call.1} parent=15 // pred_check
          %p124 = pneg %p45
        $region18: #{tpu_custom_call.1} parent=15 // pred_check_branch
          %126 = sbr.rel (%p124) target = $region20
        $region19: #{tpu_custom_call.1} parent=15 // pred_region
          %s127 = sadd.s32 %s18, %s19
          %s128 = smul.u32 16, %s127
          %p129 = scmp.lt.s32.totalorder %s128, 31
          %s130 = scalar_select %p129, %s128, 31
          %s131 = smul.addr %s130, 8
          %s132 = scalar_lea.vmem %s0, %s131
          %s133 = sadd.s32 %s18, %s19
          %s134 = smul.u32 16, %s133
        $region20: #{tpu_custom_call.1} parent=15 // pred_fallthru
          _
        // Predicated region
        $region21: #{tpu_custom_call.1} parent=15 // pred_check
          %p135 = pneg %p73
        $region22: #{tpu_custom_call.1} parent=15 // pred_check_branch
          %137 = sbr.rel (%p135) target = $region24
        $region23: #{tpu_custom_call.1} parent=15 // pred_region
          %s138 = sadd.s32 %s18, %s19
          %p139 = scmp.lt.s32.totalorder %s138, 1
          %s140 = scalar_select %p139, %s138, 1
          %s141 = smul.addr %s140, 4
          %s142 = scalar_lea.vmem %s1, %s141
          %s143 = sadd.s32 %s18, %s19
        $region24: #{tpu_custom_call.1} parent=15 // pred_fallthru
          _
      $region16: #{tpu_custom_call.1} parent=5 // pred_fallthru
        _
      %p144 = scmp.le.s32.totalorder 1, %s11
      %p145 = scmp.lt.s32.totalorder %s11, 3
      %p146 = pnand %p144, %p145
      %p147 = pneg %p146
      // Predicated region
      $region25: #{tpu_custom_call.1} parent=5 // pred_check
        _
      $region26: #{tpu_custom_call.1} parent=5 // pred_check_branch
        %149 = sbr.rel (%p146) target = $region28
      $region27: #{tpu_custom_call.1} parent=5 // pred_region
        %s150 = ssub.s32 %s11, 1
        %s151 = sadd.s32 %s20, %s21
        %s152 = smul.u32 16, %s151
        %p153 = scmp.lt.s32.totalorder %s152, 31
        %s154 = scalar_select %p153, %s152, 31
        %s155 = smul.addr %s154, 8
        %s156 = scalar_lea.vmem %s0, %s155
        %p157 = pneg %p51
        %p158 = pneg %p48
        %s159 = sadd.s32 %s20, %s21
        %p160 = scmp.lt.s32.totalorder %s159, 1
        %s161 = scalar_select %p160, %s159, 1
        %s162 = smul.addr %s161, 4
        %s163 = scalar_lea.vmem %s1, %s162
        %p164 = pneg %p79
        %p165 = pneg %p76
        %p166 = pneg %p105
        %p167 = pneg %p102
        %s168 = sand.u32 %s92, 1
        %s169 = scalar_lea.sflag [#allocation3], %s168
        %s170 = sand.u32 %s92, 1
        %s171 = smul.addr %s170, 8
        %s172 = scalar_lea.vmem [#allocation2], %s171
        %s173 = sadd.s32 %s20, %s21
        %s174 = smul.u32 16, %s173
        %p175 = scmp.lt.s32.totalorder %s174, 31
        %s176 = scalar_select %p175, %s174, 31
        %s177 = smul.addr %s176, 8
        %s178 = scalar_lea.vmem %s0, %s177
        %s179 = sadd.s32 %s20, %s21
        %s180 = smul.u32 16, %s179
        %s181 = sadd.s32 %s20, %s21
        %p182 = scmp.lt.s32.totalorder %s181, 1
        %s183 = scalar_select %p182, %s181, 1
        %s184 = smul.addr %s183, 4
        %s185 = scalar_lea.vmem %s1, %s184
        %s186 = sadd.s32 %s20, %s21
        %p187 = scmp.eq.s32.totalorder %s21, 0
        // Predicated region
        $region29: #{tpu_custom_call.1} parent=27 // pred_check
          %p188 = pneg %p187
        $region30: #{tpu_custom_call.1} parent=27 // pred_check_branch
          %190 = sbr.rel (%p188) target = $region32
        $region31: #{tpu_custom_call.1} parent=27 // pred_region
          %vm191 = vcmask 261120
          %192 = vst.msk [vmem:[%s172] sm:$0xff] %vm191, 0.0
        $region32: #{tpu_custom_call.1} parent=27 // pred_fallthru
          _
        %v193 = vld [vmem:[%s178] sm:$0xff]
        %v194 = vld [vmem:[%s178 + $0x8] sm:$0xff]
        %v195 = vld [vmem:[%s178 + $0x10] sm:$0xff]
        %v196 = vld [vmem:[%s178 + $0x18] sm:$0xff]
        %v197 = vld [vmem:[%s178 + $0x20] sm:$0xff]
        %v198 = vld [vmem:[%s178 + $0x28] sm:$0xff]
        %v199 = vld [vmem:[%s178 + $0x30] sm:$0xff]
        %v200 = vld [vmem:[%s178 + $0x38] sm:$0xff]
        %v201 = vld [vmem:[%s178 + $0x40] sm:$0xff]
        %v202 = vld [vmem:[%s178 + $0x48] sm:$0xff]
        %v203 = vld [vmem:[%s178 + $0x50] sm:$0xff]
        %v204 = vld [vmem:[%s178 + $0x58] sm:$0xff]
        %v205 = vld [vmem:[%s178 + $0x60] sm:$0xff]
        %v206 = vld [vmem:[%s178 + $0x68] sm:$0xff]
        %v207 = vld [vmem:[%s178 + $0x70] sm:$0xff]
        %v208 = vld [vmem:[%s178 + $0x78] sm:$0xff]
        %v209 = vmul.f32 %v193, %v193
        %v210 = vmul.f32 %v194, %v194
        %v211 = vmul.f32 %v195, %v195
        %v212 = vmul.f32 %v196, %v196
        %v213 = vmul.f32 %v197, %v197
        %v214 = vmul.f32 %v198, %v198
        %v215 = vmul.f32 %v199, %v199
        %v216 = vmul.f32 %v200, %v200
        %v217 = vmul.f32 %v201, %v201
        %v218 = vmul.f32 %v202, %v202
        %v219 = vmul.f32 %v203, %v203
        %v220 = vmul.f32 %v204, %v204
        %v221 = vmul.f32 %v205, %v205
        %v222 = vmul.f32 %v206, %v206
        %v223 = vmul.f32 %v207, %v207
        %v224 = vmul.f32 %v208, %v208
        %vm225 = vcmask 261120
        %v226 = vsel %vm225, %v209, 0.0
        %227 = vadd.xlane.f32.xlu0 %v226
        %v228 = vpop.xlane.xlu0 %227
        %v229 = vsel %vm225, %v210, 0.0
        %230 = vadd.xlane.f32.xlu0 %v229
        %v231 = vpop.xlane.xlu0 %230
        %v232 = vsel %vm225, %v211, 0.0
        %233 = vadd.xlane.f32.xlu0 %v232
        %v234 = vpop.xlane.xlu0 %233
        %v235 = vsel %vm225, %v212, 0.0
        %236 = vadd.xlane.f32.xlu0 %v235
        %v237 = vpop.xlane.xlu0 %236
        %v238 = vsel %vm225, %v213, 0.0
        %239 = vadd.xlane.f32.xlu0 %v238
        %v240 = vpop.xlane.xlu0 %239
        %v241 = vsel %vm225, %v214, 0.0
        %242 = vadd.xlane.f32.xlu0 %v241
        %v243 = vpop.xlane.xlu0 %242
        %v244 = vsel %vm225, %v215, 0.0
        %245 = vadd.xlane.f32.xlu0 %v244
        %v246 = vpop.xlane.xlu0 %245
        %v247 = vsel %vm225, %v216, 0.0
        %248 = vadd.xlane.f32.xlu0 %v247
        %v249 = vpop.xlane.xlu0 %248
        %v250 = vsel %vm225, %v217, 0.0
        %251 = vadd.xlane.f32.xlu0 %v250
        %v252 = vpop.xlane.xlu0 %251
        %v253 = vsel %vm225, %v218, 0.0
        %254 = vadd.xlane.f32.xlu0 %v253
        %v255 = vpop.xlane.xlu0 %254
        %v256 = vsel %vm225, %v219, 0.0
        %257 = vadd.xlane.f32.xlu0 %v256
        %v258 = vpop.xlane.xlu0 %257
        %v259 = vsel %vm225, %v220, 0.0
        %260 = vadd.xlane.f32.xlu0 %v259
        %v261 = vpop.xlane.xlu0 %260
        %v262 = vsel %vm225, %v221, 0.0
        %263 = vadd.xlane.f32.xlu0 %v262
        %v264 = vpop.xlane.xlu0 %263
        %v265 = vsel %vm225, %v222, 0.0
        %266 = vadd.xlane.f32.xlu0 %v265
        %v267 = vpop.xlane.xlu0 %266
        %v268 = vsel %vm225, %v223, 0.0
        %269 = vadd.xlane.f32.xlu0 %v268
        %v270 = vpop.xlane.xlu0 %269
        %v271 = vsel %vm225, %v224, 0.0
        %272 = vadd.xlane.f32.xlu0 %v271
        %v273 = vpop.xlane.xlu0 %272
        %v274 = vmax.f32 %v228, 1e-24
        %v275 = vmax.f32 %v231, 1e-24
        %v276 = vmax.f32 %v234, 1e-24
        %v277 = vmax.f32 %v237, 1e-24
        %v278 = vmax.f32 %v240, 1e-24
        %v279 = vmax.f32 %v243, 1e-24
        %v280 = vmax.f32 %v246, 1e-24
        %v281 = vmax.f32 %v249, 1e-24
        %v282 = vmax.f32 %v252, 1e-24
        %v283 = vmax.f32 %v255, 1e-24
        %v284 = vmax.f32 %v258, 1e-24
        %v285 = vmax.f32 %v261, 1e-24
        %v286 = vmax.f32 %v264, 1e-24
        %v287 = vmax.f32 %v267, 1e-24
        %v288 = vmax.f32 %v270, 1e-24
        %v289 = vmax.f32 %v273, 1e-24
        %v290 = vrsqrt.pop %v274
        %v291 = vmul.f32 %v290, %v274
        %v292 = vmul.f32 %v291, %v290
        %v293 = vmul.f32 0.5, %v292
        %v294 = vsub.f32 1.5, %v293
        %v295 = vmul.f32 %v290, %v294
        %vm296 = vweird.f32 %v274
        %vm297 = vweird.f32 %v290
        %vm298 = vmor %vm296, %vm297
        %v299 = vsel %vm298, %v290, %v295
        %v300 = vrsqrt.pop %v275
        %v301 = vmul.f32 %v300, %v275
        %v302 = vmul.f32 %v301, %v300
        %v303 = vmul.f32 0.5, %v302
        %v304 = vsub.f32 1.5, %v303
        %v305 = vmul.f32 %v300, %v304
        %vm306 = vweird.f32 %v275
        %vm307 = vweird.f32 %v300
        %vm308 = vmor %vm306, %vm307
        %v309 = vsel %vm308, %v300, %v305
        %v310 = vrsqrt.pop %v276
        %v311 = vmul.f32 %v310, %v276
        %v312 = vmul.f32 %v311, %v310
        %v313 = vmul.f32 0.5, %v312
        %v314 = vsub.f32 1.5, %v313
        %v315 = vmul.f32 %v310, %v314
        %vm316 = vweird.f32 %v276
        %vm317 = vweird.f32 %v310
        %vm318 = vmor %vm316, %vm317
        %v319 = vsel %vm318, %v310, %v315
        %v320 = vrsqrt.pop %v277
        %v321 = vmul.f32 %v320, %v277
        %v322 = vmul.f32 %v321, %v320
        %v323 = vmul.f32 0.5, %v322
        %v324 = vsub.f32 1.5, %v323
        %v325 = vmul.f32 %v320, %v324
        %vm326 = vweird.f32 %v277
        %vm327 = vweird.f32 %v320
        %vm328 = vmor %vm326, %vm327
        %v329 = vsel %vm328, %v320, %v325
        %v330 = vrsqrt.pop %v278
        %v331 = vmul.f32 %v330, %v278
        %v332 = vmul.f32 %v331, %v330
        %v333 = vmul.f32 0.5, %v332
        %v334 = vsub.f32 1.5, %v333
        %v335 = vmul.f32 %v330, %v334
        %vm336 = vweird.f32 %v278
        %vm337 = vweird.f32 %v330
        %vm338 = vmor %vm336, %vm337
        %v339 = vsel %vm338, %v330, %v335
        %v340 = vrsqrt.pop %v279
        %v341 = vmul.f32 %v340, %v279
        %v342 = vmul.f32 %v341, %v340
        %v343 = vmul.f32 0.5, %v342
        %v344 = vsub.f32 1.5, %v343
        %v345 = vmul.f32 %v340, %v344
        %vm346 = vweird.f32 %v279
        %vm347 = vweird.f32 %v340
        %vm348 = vmor %vm346, %vm347
        %v349 = vsel %vm348, %v340, %v345
        %v350 = vrsqrt.pop %v280
        %v351 = vmul.f32 %v350, %v280
        %v352 = vmul.f32 %v351, %v350
        %v353 = vmul.f32 0.5, %v352
        %v354 = vsub.f32 1.5, %v353
        %v355 = vmul.f32 %v350, %v354
        %vm356 = vweird.f32 %v280
        %vm357 = vweird.f32 %v350
        %vm358 = vmor %vm356, %vm357
        %v359 = vsel %vm358, %v350, %v355
        %v360 = vrsqrt.pop %v281
        %v361 = vmul.f32 %v360, %v281
        %v362 = vmul.f32 %v361, %v360
        %v363 = vmul.f32 0.5, %v362
        %v364 = vsub.f32 1.5, %v363
        %v365 = vmul.f32 %v360, %v364
        %vm366 = vweird.f32 %v281
        %vm367 = vweird.f32 %v360
        %vm368 = vmor %vm366, %vm367
        %v369 = vsel %vm368, %v360, %v365
        %v370 = vrsqrt.pop %v282
        %v371 = vmul.f32 %v370, %v282
        %v372 = vmul.f32 %v371, %v370
        %v373 = vmul.f32 0.5, %v372
        %v374 = vsub.f32 1.5, %v373
        %v375 = vmul.f32 %v370, %v374
        %vm376 = vweird.f32 %v282
        %vm377 = vweird.f32 %v370
        %vm378 = vmor %vm376, %vm377
        %v379 = vsel %vm378, %v370, %v375
        %v380 = vrsqrt.pop %v283
        %v381 = vmul.f32 %v380, %v283
        %v382 = vmul.f32 %v381, %v380
        %v383 = vmul.f32 0.5, %v382
        %v384 = vsub.f32 1.5, %v383
        %v385 = vmul.f32 %v380, %v384
        %vm386 = vweird.f32 %v283
        %vm387 = vweird.f32 %v380
        %vm388 = vmor %vm386, %vm387
        %v389 = vsel %vm388, %v380, %v385
        %v390 = vrsqrt.pop %v284
        %v391 = vmul.f32 %v390, %v284
        %v392 = vmul.f32 %v391, %v390
        %v393 = vmul.f32 0.5, %v392
        %v394 = vsub.f32 1.5, %v393
        %v395 = vmul.f32 %v390, %v394
        %vm396 = vweird.f32 %v284
        %vm397 = vweird.f32 %v390
        %vm398 = vmor %vm396, %vm397
        %v399 = vsel %vm398, %v390, %v395
        %v400 = vrsqrt.pop %v285
        %v401 = vmul.f32 %v400, %v285
        %v402 = vmul.f32 %v401, %v400
        %v403 = vmul.f32 0.5, %v402
        %v404 = vsub.f32 1.5, %v403
        %v405 = vmul.f32 %v400, %v404
        %vm406 = vweird.f32 %v285
        %vm407 = vweird.f32 %v400
        %vm408 = vmor %vm406, %vm407
        %v409 = vsel %vm408, %v400, %v405
        %v410 = vrsqrt.pop %v286
        %v411 = vmul.f32 %v410, %v286
        %v412 = vmul.f32 %v411, %v410
        %v413 = vmul.f32 0.5, %v412
        %v414 = vsub.f32 1.5, %v413
        %v415 = vmul.f32 %v410, %v414
        %vm416 = vweird.f32 %v286
        %vm417 = vweird.f32 %v410
        %vm418 = vmor %vm416, %vm417
        %v419 = vsel %vm418, %v410, %v415
        %v420 = vrsqrt.pop %v287
        %v421 = vmul.f32 %v420, %v287
        %v422 = vmul.f32 %v421, %v420
        %v423 = vmul.f32 0.5, %v422
        %v424 = vsub.f32 1.5, %v423
        %v425 = vmul.f32 %v420, %v424
        %vm426 = vweird.f32 %v287
        %vm427 = vweird.f32 %v420
        %vm428 = vmor %vm426, %vm427
        %v429 = vsel %vm428, %v420, %v425
        %v430 = vrsqrt.pop %v288
        %v431 = vmul.f32 %v430, %v288
        %v432 = vmul.f32 %v431, %v430
        %v433 = vmul.f32 0.5, %v432
        %v434 = vsub.f32 1.5, %v433
        %v435 = vmul.f32 %v430, %v434
        %vm436 = vweird.f32 %v288
        %vm437 = vweird.f32 %v430
        %vm438 = vmor %vm436, %vm437
        %v439 = vsel %vm438, %v430, %v435
        %v440 = vrsqrt.pop %v289
        %v441 = vmul.f32 %v440, %v289
        %v442 = vmul.f32 %v441, %v440
        %v443 = vmul.f32 0.5, %v442
        %v444 = vsub.f32 1.5, %v443
        %v445 = vmul.f32 %v440, %v444
        %vm446 = vweird.f32 %v289
        %vm447 = vweird.f32 %v440
        %vm448 = vmor %vm446, %vm447
        %v449 = vsel %vm448, %v440, %v445
        %v450 = vmul.f32 %v193, %v299
        %v451 = vmul.f32 %v194, %v309
        %v452 = vmul.f32 %v195, %v319
        %v453 = vmul.f32 %v196, %v329
        %v454 = vmul.f32 %v197, %v339
        %v455 = vmul.f32 %v198, %v349
        %v456 = vmul.f32 %v199, %v359
        %v457 = vmul.f32 %v200, %v369
        %v458 = vmul.f32 %v201, %v379
        %v459 = vmul.f32 %v202, %v389
        %v460 = vmul.f32 %v203, %v399
        %v461 = vmul.f32 %v204, %v409
        %v462 = vmul.f32 %v205, %v419
        %v463 = vmul.f32 %v206, %v429
        %v464 = vmul.f32 %v207, %v439
        %v465 = vmul.f32 %v208, %v449
        %v466 = vpack.c.bf16 %v451, %v450
        %v467 = vpack.c.bf16 %v453, %v452
        %v468 = vpack.c.bf16 %v455, %v454
        %v469 = vpack.c.bf16 %v457, %v456
        %v470 = vpack.c.bf16 %v459, %v458
        %v471 = vpack.c.bf16 %v461, %v460
        %v472 = vpack.c.bf16 %v463, %v462
        %v473 = vpack.c.bf16 %v465, %v464
        %v474 = vld [vmem:[%s185] sm:$0xf]
        %v475 = vld [vmem:[%s172] sm:$0xff]
        %476 = vmatpush.bf16.msra.mxu0 %v473
        %477 = vmatpush.bf16.msra.mxu0 %v472
        %478 = vmatpush.bf16.msra.mxu0 %v471
        %479 = vmatpush.bf16.msra.mxu0 %v470
        %480 = vmatpush.bf16.msra.mxu0 %v469
        %481 = vmatpush.bf16.msra.mxu0 %v468
        %482 = vmatpush.bf16.msra.mxu0 %v467
        %483 = vmatpush.bf16.msra.mxu0 %v466
        %484 = vmatmul.bf16.gmra.mxu0 %v474
        %v485 = vpop.f32.mrf.mxu0
        %v486 = vadd.f32 0.0, %v485
        %v487 = vpop.f32.mrf.mxu0
        %488 = vdwg.mxu0
        %v489 = vadd.f32 %v475, %v486
        %490 = vst.msk [vmem:[%s172] sm:$0xff] %vm225, %v489
        %s491 = sand.u32 %s92, 1
        %s492 = scalar_lea.sflag [#allocation3], %s491
        %s493 = sand.u32 %s92, 1
        %s494 = smul.addr %s493, 8
        %s495 = scalar_lea.vmem [#allocation2], %s494
        // Predicated region
        $region33: #{tpu_custom_call.1} parent=27 // pred_check
          %p496 = pneg %p102
        $region34: #{tpu_custom_call.1} parent=27 // pred_check_branch
          %498 = sbr.rel (%p496) target = $region36
        $region35: #{tpu_custom_call.1} parent=27 // pred_region
          %500 = vsyncadd %s492, 0
          %s501 = smul.addr %s20, 8
          %s502 = scalar_lea.hbm %s2, %s501
          %s504 = sshll.u32 %s495, 4
          %s505 = int_to_ptr.vmem [resolvable:$true] %s504
          %s506 = sshll.u32 %s502, 4
          %s507 = int_to_ptr.hbm [resolvable:$true] %s506
          %509 = dma.vmem_to_hbm [thread:$0]  %s505, 128, %s507, %s492
        $region36: #{tpu_custom_call.1} parent=27 // pred_fallthru
          _
      $region28: #{tpu_custom_call.1} parent=5 // pred_fallthru
        _
      %p510 = scmp.le.s32.totalorder 2, %s11
      // Predicated region
      $region37: #{tpu_custom_call.1} parent=5 // pred_check
        %p511 = pneg %p510
      $region38: #{tpu_custom_call.1} parent=5 // pred_check_branch
        %513 = sbr.rel (%p511) target = $region40
      $region39: #{tpu_custom_call.1} parent=5 // pred_region
        %s514 = ssub.s32 %s11, 2
        // Predicated region
        $region41: #{tpu_custom_call.1} parent=39 // pred_check
          %p515 = pneg %p108
        $region42: #{tpu_custom_call.1} parent=39 // pred_check_branch
          %517 = sbr.rel (%p515) target = $region44
        $region43: #{tpu_custom_call.1} parent=39 // pred_region
          %s518 = sand.u32 %s93, 1
          %s519 = scalar_lea.sflag [#allocation3], %s518
          %s520 = sand.u32 %s93, 1
          %s521 = smul.addr %s520, 8
          %s522 = scalar_lea.vmem [#allocation2], %s521
          %524 = dma.done %s519, 128
        $region44: #{tpu_custom_call.1} parent=39 // pred_fallthru
          _
      $region40: #{tpu_custom_call.1} parent=5 // pred_fallthru
        _
    $region6: #{tpu_custom_call.1} parent=1 // loop_footer
      %s15 = sadd.s32 1, %s11
    $region7: #{tpu_custom_call.1} parent=1 // loop_footer_branch
      %10 = sbr.rel target = $region3
    $region8: #{tpu_custom_call.1} parent=1 // loop_exit
      _
    %525 = vsyncpa [#allocation3], 1
    %s526 = scalar_lea.sflag [#allocation3], 1
    %527 = vsyncpa %s526, 1

</llo_original>
